<compile_context>
chip_gen: v7x
topology: tpu7x:2x2x1
jax: 0.10.0
libtpu: 0.0.40
codegen_flags: <defaults>
</compile_context>

<pallas_src>
import jax
import jax.numpy as jnp
from jax.experimental import pallas as pl
from jax.experimental.pallas import tpu as pltpu

IMG_SIZE = 28 * 28          # 784
H1 = 256                    # hidden layer 0 width (already a 128-lane multiple)
H2 = 32                     # hidden layer 1 true width
H2_PAD = 128                # padded to one full vreg of lanes
OUT = 10                    # true output width
OUT_PAD = 128               # padded so the output store is lane-dense
TB_MAX = 512                # max batch tile (multiple of 16)


def _round_up(n, m):
    return (n + m - 1) // m * m


def _gelu_exact(x):
    # torch.nn.functional.gelu default ("none" approximation): erf-based GELU
    return 0.5 * x * (1.0 + jax.lax.erf(x * 0.7071067811865476))


def mlp_kernel(x_ref, w0_ref, b0_ref, w1_ref, b1_ref, w2_ref, b2_ref, o_ref):
    cd = w0_ref.dtype  # matmul compute dtype (bf16 by default, f32 optional)
    # hidden layer 0: (TB, 784) @ (784, 256) -> f32 acc, + (1, 256) bias, GELU
    h = jnp.dot(x_ref[...].astype(cd), w0_ref[...],
                preferred_element_type=jnp.float32)
    h = _gelu_exact(h + b0_ref[...])          # f32 elementwise (safe on v5e too)
    # hidden layer 1: (TB, 256) @ (256, 128[=32 zero-padded]) + bias, GELU
    h = jnp.dot(h.astype(cd), w1_ref[...], preferred_element_type=jnp.float32)
    h = _gelu_exact(h + b1_ref[...])
    # output layer: (TB, 128) @ (128, 128[=10 zero-padded]) + bias
    o = jnp.dot(h.astype(cd), w2_ref[...], preferred_element_type=jnp.float32)
    o_ref[...] = (o + b2_ref[...]).astype(o_ref.dtype)   # lane-dense f32 store


def prepare_params(params, matmul_dtype=jnp.bfloat16):
    """One-time weight prep: cast matmul weights and zero-pad narrow dims.

    Zero padding is exact: GELU(0)=0 and x+0=x, so numerics are unchanged.
    """
    w0, b0, w1, b1, w2, b2 = params
    w0c = jnp.asarray(w0, matmul_dtype)
    b0c = jnp.asarray(b0, jnp.float32)
    w1p = jnp.pad(jnp.asarray(w1, matmul_dtype), ((0, 0), (0, H2_PAD - H2)))
    b1p = jnp.pad(jnp.asarray(b1, jnp.float32), ((0, 0), (0, H2_PAD - H2)))
    w2p = jnp.pad(jnp.asarray(w2, matmul_dtype),
                  ((0, H2_PAD - H2), (0, OUT_PAD - OUT)))
    b2p = jnp.pad(jnp.asarray(b2, jnp.float32), ((0, 0), (0, OUT_PAD - OUT)))
    return (w0c, b0c, w1p, b1p, w2p, b2p)


def _pick_tb(B, tb_max):
    """Largest tile <= tb_max, sublane-aligned, with >=2 steps for big batches
    so both v7x TensorCores get work via the 'parallel' grid axis."""
    align = 16 if B >= 16 else 8
    tb = min(tb_max, _round_up(B, align))
    if pl.cdiv(B, tb) < 2 and B > 2 * align:
        tb = _round_up(pl.cdiv(B, 2), align)
    return tb


def my_mnist_forward(x_nchw, prepared_params, *, tb_max=TB_MAX):
    w0, b0, w1, b1, w2, b2 = prepared_params
    B = x_nchw.shape[0]
    # Free metadata reshape; dtype is NOT changed here (cast happens in-kernel).
    x = x_nchw.reshape(B, IMG_SIZE)

    tb = _pick_tb(B, tb_max)
    grid = (pl.cdiv(B, tb),)   # partial last block: garbage rows are row-local
                               # and the OOB output writes are masked.

    out = pl.pallas_call(
        mlp_kernel,
        out_shape=jax.ShapeDtypeStruct((B, OUT_PAD), jnp.float32),
        grid=grid,
        in_specs=[
            pl.BlockSpec((tb, IMG_SIZE), lambda i: (i, 0)),       # x tile
            # Constant-index blocks: fetched once, resident across grid steps.
            pl.BlockSpec((IMG_SIZE, H1), lambda i: (0, 0)),       # w0
            pl.BlockSpec((1, H1), lambda i: (0, 0)),              # b0
            pl.BlockSpec((H1, H2_PAD), lambda i: (0, 0)),         # w1 (padded)
            pl.BlockSpec((1, H2_PAD), lambda i: (0, 0)),          # b1 (padded)
            pl.BlockSpec((H2_PAD, OUT_PAD), lambda i: (0, 0)),    # w2 (padded)
            pl.BlockSpec((1, OUT_PAD), lambda i: (0, 0)),         # b2 (padded)
        ],
        out_specs=pl.BlockSpec((tb, OUT_PAD), lambda i: (i, 0)),
        compiler_params=pltpu.CompilerParams(
            dimension_semantics=("parallel",)),
    )(x, w0, b0, w1, b1, w2, b2)

    return out[:, :OUT]


def init_params(key):
    """Deterministic init mimicking torch.nn.Linear default U(-1/sqrt(in), 1/sqrt(in))."""
    dims = (IMG_SIZE, H1, H2, OUT)
    params = []
    for fan_in, fan_out in zip(dims[:-1], dims[1:]):
        key, kw, kb = jax.random.split(key, 3)
        bound = 1.0 / jnp.sqrt(float(fan_in))
        w = jax.random.uniform(kw, (fan_in, fan_out), jnp.float32, -bound, bound)
        b = jax.random.uniform(kb, (1, fan_out), jnp.float32, -bound, bound)
        params += [w, b]
    return tuple(params)


def _reference(x_nchw, params):
    w0, b0, w1, b1, w2, b2 = params
    x = x_nchw.reshape(x_nchw.shape[0], IMG_SIZE)
    h = jax.nn.gelu(x @ w0 + b0, approximate=False)
    h = jax.nn.gelu(h @ w1 + b1, approximate=False)
    return h @ w2 + b2


if __name__ == "__main__":
    key = jax.random.PRNGKey(0)
    kx, kp = jax.random.split(key)
    raw_params = init_params(kp)

    # One-time weight prep (bf16 MXU path is the default).
    params_bf16 = jax.block_until_ready(prepare_params(raw_params))

    # 1) Small MNIST-like batch, NCHW, default bf16 matmul path.
    x_small = jax.random.normal(kx, (8, 1, 28, 28), dtype=jnp.float32)
    out = jax.block_until_ready(my_mnist_forward(x_small, params_bf16))
    ref = _reference(x_small, raw_params)
    assert out.shape == (8, OUT)
    assert jnp.allclose(out, ref, atol=5e-2, rtol=5e-2), "bf16 mismatch (small batch)"

    # 2) Larger, non-tile-multiple batch: exercises cdiv grid with a masked
    #    partial last block and a >=2-step parallel grid (both v7x TCs).
    x_big = jax.random.normal(jax.random.PRNGKey(1), (300, 1, 28, 28),
                              dtype=jnp.float32)
    out_big = jax.block_until_ready(my_mnist_forward(x_big, params_bf16))
    ref_big = _reference(x_big, raw_params)
    assert out_big.shape == (300, OUT)
    assert jnp.allclose(out_big, ref_big, atol=5e-2, rtol=5e-2), \
        "bf16 mismatch (large batch)"

    # 3) Optional exact-parity path (f32 matmuls) for torch-default numerics.
    params_f32 = jax.block_until_ready(
        prepare_params(raw_params, matmul_dtype=jnp.float32))
    out_f32 = jax.block_until_ready(my_mnist_forward(x_small, params_f32))
    assert jnp.allclose(out_f32, ref, atol=1e-4, rtol=1e-4), "f32 mismatch vs reference"

    print("KERNEL_OK")
</pallas_src>

<mosaic_0001>
module attributes {stable_mosaic.version = 11 : i64} {
  func.func @mlp_kernel(%arg0: i32, %arg1: memref<8x784xf32, #tpu.memory_space<vmem>>, %arg2: memref<784x256xbf16, #tpu.memory_space<vmem>>, %arg3: memref<1x256xf32, #tpu.memory_space<vmem>>, %arg4: memref<256x128xbf16, #tpu.memory_space<vmem>>, %arg5: memref<1x128xf32, #tpu.memory_space<vmem>>, %arg6: memref<128x128xbf16, #tpu.memory_space<vmem>>, %arg7: memref<1x128xf32, #tpu.memory_space<vmem>>, %arg8: memref<8x128xf32, #tpu.memory_space<vmem>>) attributes {dimension_semantics = [#tpu.dimension_semantics<parallel>], iteration_bounds = array<i64: 1>, scalar_prefetch = 0 : i64, scratch_operands = 0 : i64, tpu.core_type = #tpu.core_type<tc>, window_params = [{transform_indices = @transform_0, window_bounds = array<i64: 8, 784>}, {pipeline_mode = #tpu.pipeline_mode<synchronous>, transform_indices = @transform_1, window_bounds = array<i64: 784, 256>}, {pipeline_mode = #tpu.pipeline_mode<synchronous>, transform_indices = @transform_2, window_bounds = array<i64: 1, 256>}, {pipeline_mode = #tpu.pipeline_mode<synchronous>, transform_indices = @transform_3, window_bounds = array<i64: 256, 128>}, {pipeline_mode = #tpu.pipeline_mode<synchronous>, transform_indices = @transform_4, window_bounds = array<i64: 1, 128>}, {pipeline_mode = #tpu.pipeline_mode<synchronous>, transform_indices = @transform_5, window_bounds = array<i64: 128, 128>}, {pipeline_mode = #tpu.pipeline_mode<synchronous>, transform_indices = @transform_6, window_bounds = array<i64: 1, 128>}, {transform_indices = @transform_7, window_bounds = array<i64: 8, 128>}]} {
    %c0 = arith.constant 0 : index
    %c0_0 = arith.constant 0 : index
    %0 = vector.load %arg1[%c0, %c0_0] : memref<8x784xf32, #tpu.memory_space<vmem>>, vector<8x784xf32>
    %1 = arith.truncf %0 : vector<8x784xf32> to vector<8x784xbf16>
    %c0_1 = arith.constant 0 : index
    %c0_2 = arith.constant 0 : index
    %2 = vector.load %arg2[%c0_1, %c0_2] : memref<784x256xbf16, #tpu.memory_space<vmem>>, vector<784x256xbf16>
    %cst = arith.constant dense<0.000000e+00> : vector<8x256xf32>
    %3 = tpu.matmul %1, %2, %cst {dimension_numbers = #tpu.dot_dimension_numbers<[1], [0], [0], [1], [0, 0, 1, 1], [], []>} : vector<8x784xbf16>, vector<784x256xbf16>, vector<8x256xf32> -> vector<8x256xf32>
    %c0_3 = arith.constant 0 : index
    %c0_4 = arith.constant 0 : index
    %4 = vector.load %arg3[%c0_3, %c0_4] : memref<1x256xf32, #tpu.memory_space<vmem>>, vector<1x256xf32>
    %5 = vector.broadcast %4 : vector<1x256xf32> to vector<8x256xf32>
    %6 = arith.addf %3, %5 : vector<8x256xf32>
    %cst_5 = arith.constant 5.000000e-01 : f32
    %7 = vector.broadcast %cst_5 : f32 to vector<8x256xf32>
    %8 = arith.mulf %7, %6 : vector<8x256xf32>
    %cst_6 = arith.constant 0.707106769 : f32
    %9 = vector.broadcast %cst_6 : f32 to vector<8x256xf32>
    %10 = arith.mulf %6, %9 : vector<8x256xf32>
    %11 = math.erf %10 : vector<8x256xf32>
    %cst_7 = arith.constant 1.000000e+00 : f32
    %12 = vector.broadcast %cst_7 : f32 to vector<8x256xf32>
    %13 = arith.addf %12, %11 : vector<8x256xf32>
    %14 = arith.mulf %8, %13 : vector<8x256xf32>
    %15 = arith.truncf %14 : vector<8x256xf32> to vector<8x256xbf16>
    %c0_8 = arith.constant 0 : index
    %c0_9 = arith.constant 0 : index
    %16 = vector.load %arg4[%c0_8, %c0_9] : memref<256x128xbf16, #tpu.memory_space<vmem>>, vector<256x128xbf16>
    %cst_10 = arith.constant dense<0.000000e+00> : vector<8x128xf32>
    %17 = tpu.matmul %15, %16, %cst_10 {dimension_numbers = #tpu.dot_dimension_numbers<[1], [0], [0], [1], [0, 0, 1, 1], [], []>} : vector<8x256xbf16>, vector<256x128xbf16>, vector<8x128xf32> -> vector<8x128xf32>
    %c0_11 = arith.constant 0 : index
    %c0_12 = arith.constant 0 : index
    %18 = vector.load %arg5[%c0_11, %c0_12] : memref<1x128xf32, #tpu.memory_space<vmem>>, vector<1x128xf32>
    %19 = vector.broadcast %18 : vector<1x128xf32> to vector<8x128xf32>
    %20 = arith.addf %17, %19 : vector<8x128xf32>
    %cst_13 = arith.constant 5.000000e-01 : f32
    %21 = vector.broadcast %cst_13 : f32 to vector<8x128xf32>
    %22 = arith.mulf %21, %20 : vector<8x128xf32>
    %cst_14 = arith.constant 0.707106769 : f32
    %23 = vector.broadcast %cst_14 : f32 to vector<8x128xf32>
    %24 = arith.mulf %20, %23 : vector<8x128xf32>
    %25 = math.erf %24 : vector<8x128xf32>
    %cst_15 = arith.constant 1.000000e+00 : f32
    %26 = vector.broadcast %cst_15 : f32 to vector<8x128xf32>
    %27 = arith.addf %26, %25 : vector<8x128xf32>
    %28 = arith.mulf %22, %27 : vector<8x128xf32>
    %29 = arith.truncf %28 : vector<8x128xf32> to vector<8x128xbf16>
    %c0_16 = arith.constant 0 : index
    %c0_17 = arith.constant 0 : index
    %30 = vector.load %arg6[%c0_16, %c0_17] : memref<128x128xbf16, #tpu.memory_space<vmem>>, vector<128x128xbf16>
    %cst_18 = arith.constant dense<0.000000e+00> : vector<8x128xf32>
    %31 = tpu.matmul %29, %30, %cst_18 {dimension_numbers = #tpu.dot_dimension_numbers<[1], [0], [0], [1], [0, 0, 1, 1], [], []>} : vector<8x128xbf16>, vector<128x128xbf16>, vector<8x128xf32> -> vector<8x128xf32>
    %c0_19 = arith.constant 0 : index
    %c0_20 = arith.constant 0 : index
    %32 = vector.load %arg7[%c0_19, %c0_20] : memref<1x128xf32, #tpu.memory_space<vmem>>, vector<1x128xf32>
    %33 = vector.broadcast %32 : vector<1x128xf32> to vector<8x128xf32>
    %34 = arith.addf %31, %33 : vector<8x128xf32>
    %c0_21 = arith.constant 0 : index
    %c0_22 = arith.constant 0 : index
    %35 = vector.load %arg8[%c0_21, %c0_22] : memref<8x128xf32, #tpu.memory_space<vmem>>, vector<8x128xf32>
    tpu.vector_store %arg8[%c0_21, %c0_22], %34 {strides = array<i32>} : memref<8x128xf32, #tpu.memory_space<vmem>>, vector<8x128xf32>,
    return
  }
  func.func @transform_0(%arg0: i32) -> (i32, i32) {
    %c0_i32 = arith.constant 0 : i32
    %c0_i32_0 = arith.constant 0 : i32
    return %arg0, %c0_i32 : i32, i32
  }
  func.func @transform_1(%arg0: i32) -> (i32, i32) {
    %c0_i32 = arith.constant 0 : i32
    %c0_i32_0 = arith.constant 0 : i32
    %c0_i32_1 = arith.constant 0 : i32
    return %c0_i32, %c0_i32_0 : i32, i32
  }
  func.func @transform_2(%arg0: i32) -> (i32, i32) {
    %c0_i32 = arith.constant 0 : i32
    %c0_i32_0 = arith.constant 0 : i32
    %c0_i32_1 = arith.constant 0 : i32
    return %c0_i32, %c0_i32_0 : i32, i32
  }
  func.func @transform_3(%arg0: i32) -> (i32, i32) {
    %c0_i32 = arith.constant 0 : i32
    %c0_i32_0 = arith.constant 0 : i32
    %c0_i32_1 = arith.constant 0 : i32
    return %c0_i32, %c0_i32_0 : i32, i32
  }
  func.func @transform_4(%arg0: i32) -> (i32, i32) {
    %c0_i32 = arith.constant 0 : i32
    %c0_i32_0 = arith.constant 0 : i32
    %c0_i32_1 = arith.constant 0 : i32
    return %c0_i32, %c0_i32_0 : i32, i32
  }
  func.func @transform_5(%arg0: i32) -> (i32, i32) {
    %c0_i32 = arith.constant 0 : i32
    %c0_i32_0 = arith.constant 0 : i32
    %c0_i32_1 = arith.constant 0 : i32
    return %c0_i32, %c0_i32_0 : i32, i32
  }
  func.func @transform_6(%arg0: i32) -> (i32, i32) {
    %c0_i32 = arith.constant 0 : i32
    %c0_i32_0 = arith.constant 0 : i32
    %c0_i32_1 = arith.constant 0 : i32
    return %c0_i32, %c0_i32_0 : i32, i32
  }
  func.func @transform_7(%arg0: i32) -> (i32, i32) {
    %c0_i32 = arith.constant 0 : i32
    %c0_i32_0 = arith.constant 0 : i32
    return %arg0, %c0_i32 : i32, i32
  }
}

</mosaic_0001>

<llo_original>
// kernel: tpu_custom_call.1
$region0: #{tpu_custom_call.1}
  #allocation0 [shape = 'u32[]', space=smem, size = 0x4, offset = 0x4, fixed_abs, tag = 'smem constant byte address 0x4 - core index']
  #allocation1 [shape = 'u32[144,128]{1,0:T(1,128)}', space=vmem, size = 0x12000, scoped, tag = 'internal scratch']
  %s0 = inlined_call_operand.hbm [shape: f32[8,784], index: 0, kind: input, shape index: {}]
  %s1 = inlined_call_operand.hbm [shape: bf16[784,256], index: 1, kind: input, shape index: {}]
  %s2 = inlined_call_operand.vmem [shape: f32[1,256], index: 2, kind: input, shape index: {}]
  %s3 = inlined_call_operand.hbm [shape: bf16[256,128], index: 3, kind: input, shape index: {}]
  %s4 = inlined_call_operand.vmem [shape: f32[1,128], index: 4, kind: input, shape index: {}]
  %s5 = inlined_call_operand.hbm [shape: bf16[128,128], index: 5, kind: input, shape index: {}]
  %s6 = inlined_call_operand.vmem [shape: f32[1,128], index: 6, kind: input, shape index: {}]
  %s7 = inlined_call_operand.hbm [shape: f32[8,128], index: 7, kind: output, shape index: {}]
  %s8 = sld [smem:[#allocation0]]
  $region54: #{tpu_custom_call.1} parent=0
    _
  %s10 = ssub.s32 1, %s8
  %s11 = scalar_select 0, %s10, %s8
  $region1: #{tpu_custom_call.1} parent=0
    #allocation2 [shape = 'u8[28672]{0}', space=vmem, size = 0x7000, scoped, tag = 'input window, operand 0, single buffered']
    #allocation3 [shape = 's32[1]{0}', space=sflag, size = 0x4, scoped, tag = 'scoped memory for tpu_custom_call.1']
    #allocation4 [shape = 's32[1]{0}', space=sflag, size = 0x4, scoped, tag = 'scoped memory for tpu_custom_call.1']
    #allocation5 [shape = 'u8[401408]{0}', space=vmem, size = 0x62000, scoped, tag = 'input window, operand 1, single buffered']
    #allocation6 [shape = 's32[1]{0}', space=sflag, size = 0x4, scoped, tag = 'scoped memory for tpu_custom_call.1']
    #allocation7 [shape = 'u8[65536]{0}', space=vmem, size = 0x10000, scoped, tag = 'input window, operand 3, single buffered']
    #allocation8 [shape = 'u8[32768]{0}', space=vmem, size = 0x8000, scoped, tag = 'input window, operand 5, single buffered']
    #allocation9 [shape = 's32[1]{0}', space=sflag, size = 0x4, scoped, tag = 'scoped memory for tpu_custom_call.1']
    #allocation10 [shape = 'u8[4096]{0}', space=vmem, size = 0x1000, scoped, tag = 'output window, operand 0, single buffered']
    %12 = vsyncpa [#allocation3], 0
    %13 = vsyncpa [#allocation6], 0
    %14 = vsyncpa [#allocation9], 0
    %15 = vsyncpa [#allocation4], 0
    // Predicated region
    $region2: #{tpu_custom_call.1} parent=1 // pred_check
      _
    $region3: #{tpu_custom_call.1} parent=1 // pred_check_branch
      %17 = sbr.rel (0) target = $region5
    $region4: #{tpu_custom_call.1} parent=1 // pred_region
      %s19 = ssub.s32 896, 896
      %20 = vsyncadd [#allocation3], %s19
      %s22 = sshll.u32 [#allocation2], 4
      %s23 = int_to_ptr.vmem [resolvable:$true] %s22
      %25 = dma.hbm_to_vmem [thread:$0]  %s0, 896, %s23, [#allocation3]
    $region5: #{tpu_custom_call.1} parent=1 // pred_fallthru
      _
    // Predicated region
    $region6: #{tpu_custom_call.1} parent=1 // pred_check
      _
    $region7: #{tpu_custom_call.1} parent=1 // pred_check_branch
      %27 = sbr.rel (0) target = $region9
    $region8: #{tpu_custom_call.1} parent=1 // pred_region
      %s29 = ssub.s32 12544, 12544
      %30 = vsyncadd [#allocation6], %s29
      %s31 = sshll.u32 [#allocation5], 4
      %s32 = int_to_ptr.vmem [resolvable:$true] %s31
      %37 = dma.hbm_to_vmem [thread:$0]  %s1, 12544, %s32, [#allocation6], 128, 128, 8
    $region9: #{tpu_custom_call.1} parent=1 // pred_fallthru
      _
    // Predicated region
    $region10: #{tpu_custom_call.1} parent=1 // pred_check
      _
    $region11: #{tpu_custom_call.1} parent=1 // pred_check_branch
      %39 = sbr.rel (0) target = $region13
    $region12: #{tpu_custom_call.1} parent=1 // pred_region
      _
    $region13: #{tpu_custom_call.1} parent=1 // pred_fallthru
      _
    // Predicated region
    $region14: #{tpu_custom_call.1} parent=1 // pred_check
      _
    $region15: #{tpu_custom_call.1} parent=1 // pred_check_branch
      %41 = sbr.rel (0) target = $region17
    $region16: #{tpu_custom_call.1} parent=1 // pred_region
      %s43 = ssub.s32 2048, 2048
      %44 = vsyncadd [#allocation6], %s43
      %s45 = sshll.u32 [#allocation7], 4
      %s46 = int_to_ptr.vmem [resolvable:$true] %s45
      %51 = dma.hbm_to_vmem [thread:$0]  %s3, 2048, %s46, [#allocation6], 64, 64, 4
    $region17: #{tpu_custom_call.1} parent=1 // pred_fallthru
      _
    // Predicated region
    $region18: #{tpu_custom_call.1} parent=1 // pred_check
      _
    $region19: #{tpu_custom_call.1} parent=1 // pred_check_branch
      %53 = sbr.rel (0) target = $region21
    $region20: #{tpu_custom_call.1} parent=1 // pred_region
      _
    $region21: #{tpu_custom_call.1} parent=1 // pred_fallthru
      _
    // Predicated region
    $region22: #{tpu_custom_call.1} parent=1 // pred_check
      _
    $region23: #{tpu_custom_call.1} parent=1 // pred_check_branch
      %55 = sbr.rel (0) target = $region25
    $region24: #{tpu_custom_call.1} parent=1 // pred_region
      %s57 = ssub.s32 1024, 1024
      %58 = vsyncadd [#allocation9], %s57
      %s59 = sshll.u32 [#allocation8], 4
      %s60 = int_to_ptr.vmem [resolvable:$true] %s59
      %65 = dma.hbm_to_vmem [thread:$0]  %s5, 1024, %s60, [#allocation9], 64, 64, 4
    $region25: #{tpu_custom_call.1} parent=1 // pred_fallthru
      _
    // Predicated region
    $region26: #{tpu_custom_call.1} parent=1 // pred_check
      _
    $region27: #{tpu_custom_call.1} parent=1 // pred_check_branch
      %67 = sbr.rel (0) target = $region29
    $region28: #{tpu_custom_call.1} parent=1 // pred_region
      _
    $region29: #{tpu_custom_call.1} parent=1 // pred_fallthru
      _
    // Predicated region
    $region30: #{tpu_custom_call.1} parent=1 // pred_check
      _
    $region31: #{tpu_custom_call.1} parent=1 // pred_check_branch
      %69 = sbr.rel (0) target = $region33
    $region32: #{tpu_custom_call.1} parent=1 // pred_region
      %70 = dma.done [#allocation3], 896
    $region33: #{tpu_custom_call.1} parent=1 // pred_fallthru
      _
    // Predicated region
    $region34: #{tpu_custom_call.1} parent=1 // pred_check
      _
    $region35: #{tpu_custom_call.1} parent=1 // pred_check_branch
      %72 = sbr.rel (0) target = $region37
    $region36: #{tpu_custom_call.1} parent=1 // pred_region
      %73 = dma.done [#allocation6], 12544
    $region37: #{tpu_custom_call.1} parent=1 // pred_fallthru
      _
    // Predicated region
    $region38: #{tpu_custom_call.1} parent=1 // pred_check
      _
    $region39: #{tpu_custom_call.1} parent=1 // pred_check_branch
      %75 = sbr.rel (0) target = $region41
    $region40: #{tpu_custom_call.1} parent=1 // pred_region
      %76 = dma.done [#allocation6], 2048
    $region41: #{tpu_custom_call.1} parent=1 // pred_fallthru
      _
    // Predicated region
    $region42: #{tpu_custom_call.1} parent=1 // pred_check
      _
    $region43: #{tpu_custom_call.1} parent=1 // pred_check_branch
      %78 = sbr.rel (0) target = $region45
    $region44: #{tpu_custom_call.1} parent=1 // pred_region
      %79 = dma.done [#allocation9], 1024
    $region45: #{tpu_custom_call.1} parent=1 // pred_fallthru
      _
    %v81 = vld [vmem:[#allocation2] sm:$0xff]
    %v82 = vld [vmem:[#allocation2 + $0x8] sm:$0xff]
    %v83 = vld [vmem:[#allocation2 + $0x10] sm:$0xff]
    %v84 = vld [vmem:[#allocation2 + $0x18] sm:$0xff]
    %v85 = vld [vmem:[#allocation2 + $0x20] sm:$0xff]
    %v86 = vld [vmem:[#allocation2 + $0x28] sm:$0xff]
    %v87 = vld [vmem:[#allocation2 + $0x30] sm:$0xff]
    %v88 = vpack.c.bf16 %v81, %v81
    %v89 = vpack.c.bf16 %v82, %v82
    %v90 = vpack.c.bf16 %v83, %v83
    %v91 = vpack.c.bf16 %v84, %v84
    %v92 = vpack.c.bf16 %v85, %v85
    %v93 = vpack.c.bf16 %v86, %v86
    %v94 = vpack.c.bf16 %v87, %v87
    %v95 = vld [vmem:[#allocation5] sm:$0xff]
    %v96 = vld [vmem:[#allocation5 + $0x8] sm:$0xff]
    %v97 = vld [vmem:[#allocation5 + $0x10] sm:$0xff]
    %v98 = vld [vmem:[#allocation5 + $0x18] sm:$0xff]
    %v99 = vld [vmem:[#allocation5 + $0x20] sm:$0xff]
    %v100 = vld [vmem:[#allocation5 + $0x28] sm:$0xff]
    %v101 = vld [vmem:[#allocation5 + $0x30] sm:$0xff]
    %v102 = vld [vmem:[#allocation5 + $0x38] sm:$0xff]
    %v103 = vld [vmem:[#allocation5 + $0x40] sm:$0xff]
    %v104 = vld [vmem:[#allocation5 + $0x48] sm:$0xff]
    %v105 = vld [vmem:[#allocation5 + $0x50] sm:$0xff]
    %v106 = vld [vmem:[#allocation5 + $0x58] sm:$0xff]
    %v107 = vld [vmem:[#allocation5 + $0x60] sm:$0xff]
    %v108 = vld [vmem:[#allocation5 + $0x68] sm:$0xff]
    %v109 = vld [vmem:[#allocation5 + $0x70] sm:$0xff]
    %v110 = vld [vmem:[#allocation5 + $0x78] sm:$0xff]
    %v111 = vld [vmem:[#allocation5 + $0x80] sm:$0xff]
    %v112 = vld [vmem:[#allocation5 + $0x88] sm:$0xff]
    %v113 = vld [vmem:[#allocation5 + $0x90] sm:$0xff]
    %v114 = vld [vmem:[#allocation5 + $0x98] sm:$0xff]
    %v115 = vld [vmem:[#allocation5 + $0xa0] sm:$0xff]
    %v116 = vld [vmem:[#allocation5 + $0xa8] sm:$0xff]
    %v117 = vld [vmem:[#allocation5 + $0xb0] sm:$0xff]
    %v118 = vld [vmem:[#allocation5 + $0xb8] sm:$0xff]
    %v119 = vld [vmem:[#allocation5 + $0xc0] sm:$0xff]
    %v120 = vld [vmem:[#allocation5 + $0xc8] sm:$0xff]
    %v121 = vld [vmem:[#allocation5 + $0xd0] sm:$0xff]
    %v122 = vld [vmem:[#allocation5 + $0xd8] sm:$0xff]
    %v123 = vld [vmem:[#allocation5 + $0xe0] sm:$0xff]
    %v124 = vld [vmem:[#allocation5 + $0xe8] sm:$0xff]
    %v125 = vld [vmem:[#allocation5 + $0xf0] sm:$0xff]
    %v126 = vld [vmem:[#allocation5 + $0xf8] sm:$0xff]
    %v127 = vld [vmem:[#allocation5 + $0x100] sm:$0xff]
    %v128 = vld [vmem:[#allocation5 + $0x108] sm:$0xff]
    %v129 = vld [vmem:[#allocation5 + $0x110] sm:$0xff]
    %v130 = vld [vmem:[#allocation5 + $0x118] sm:$0xff]
    %v131 = vld [vmem:[#allocation5 + $0x120] sm:$0xff]
    %v132 = vld [vmem:[#allocation5 + $0x128] sm:$0xff]
    %v133 = vld [vmem:[#allocation5 + $0x130] sm:$0xff]
    %v134 = vld [vmem:[#allocation5 + $0x138] sm:$0xff]
    %v135 = vld [vmem:[#allocation5 + $0x140] sm:$0xff]
    %v136 = vld [vmem:[#allocation5 + $0x148] sm:$0xff]
    %v137 = vld [vmem:[#allocation5 + $0x150] sm:$0xff]
    %v138 = vld [vmem:[#allocation5 + $0x158] sm:$0xff]
    %v139 = vld [vmem:[#allocation5 + $0x160] sm:$0xff]
    %v140 = vld [vmem:[#allocation5 + $0x168] sm:$0xff]
    %v141 = vld [vmem:[#allocation5 + $0x170] sm:$0xff]
    %v142 = vld [vmem:[#allocation5 + $0x178] sm:$0xff]
    %v143 = vld [vmem:[#allocation5 + $0x180] sm:$0xff]
    %v144 = vld [vmem:[#allocation5 + $0x188] sm:$0xff]
    %v145 = vld [vmem:[#allocation5 + $0x190] sm:$0xff]
    %v146 = vld [vmem:[#allocation5 + $0x198] sm:$0xff]
    %v147 = vld [vmem:[#allocation5 + $0x1a0] sm:$0xff]
    %v148 = vld [vmem:[#allocation5 + $0x1a8] sm:$0xff]
    %v149 = vld [vmem:[#allocation5 + $0x1b0] sm:$0xff]
    %v150 = vld [vmem:[#allocation5 + $0x1b8] sm:$0xff]
    %v151 = vld [vmem:[#allocation5 + $0x1c0] sm:$0xff]
    %v152 = vld [vmem:[#allocation5 + $0x1c8] sm:$0xff]
    %v153 = vld [vmem:[#allocation5 + $0x1d0] sm:$0xff]
    %v154 = vld [vmem:[#allocation5 + $0x1d8] sm:$0xff]
    %v155 = vld [vmem:[#allocation5 + $0x1e0] sm:$0xff]
    %v156 = vld [vmem:[#allocation5 + $0x1e8] sm:$0xff]
    %v157 = vld [vmem:[#allocation5 + $0x1f0] sm:$0xff]
    %v158 = vld [vmem:[#allocation5 + $0x1f8] sm:$0xff]
    %v159 = vld [vmem:[#allocation5 + $0x200] sm:$0xff]
    %v160 = vld [vmem:[#allocation5 + $0x208] sm:$0xff]
    %v161 = vld [vmem:[#allocation5 + $0x210] sm:$0xff]
    %v162 = vld [vmem:[#allocation5 + $0x218] sm:$0xff]
    %v163 = vld [vmem:[#allocation5 + $0x220] sm:$0xff]
    %v164 = vld [vmem:[#allocation5 + $0x228] sm:$0xff]
    %v165 = vld [vmem:[#allocation5 + $0x230] sm:$0xff]
    %v166 = vld [vmem:[#allocation5 + $0x238] sm:$0xff]
    %v167 = vld [vmem:[#allocation5 + $0x240] sm:$0xff]
    %v168 = vld [vmem:[#allocation5 + $0x248] sm:$0xff]
    %v169 = vld [vmem:[#allocation5 + $0x250] sm:$0xff]
    %v170 = vld [vmem:[#allocation5 + $0x258] sm:$0xff]
    %v171 = vld [vmem:[#allocation5 + $0x260] sm:$0xff]
    %v172 = vld [vmem:[#allocation5 + $0x268] sm:$0xff]
    %v173 = vld [vmem:[#allocation5 + $0x270] sm:$0xff]
    %v174 = vld [vmem:[#allocation5 + $0x278] sm:$0xff]
    %v175 = vld [vmem:[#allocation5 + $0x280] sm:$0xff]
    %v176 = vld [vmem:[#allocation5 + $0x288] sm:$0xff]
    %v177 = vld [vmem:[#allocation5 + $0x290] sm:$0xff]
    %v178 = vld [vmem:[#allocation5 + $0x298] sm:$0xff]
    %v179 = vld [vmem:[#allocation5 + $0x2a0] sm:$0xff]
    %v180 = vld [vmem:[#allocation5 + $0x2a8] sm:$0xff]
    %v181 = vld [vmem:[#allocation5 + $0x2b0] sm:$0xff]
    %v182 = vld [vmem:[#allocation5 + $0x2b8] sm:$0xff]
    %v183 = vld [vmem:[#allocation5 + $0x2c0] sm:$0xff]
    %v184 = vld [vmem:[#allocation5 + $0x2c8] sm:$0xff]
    %v185 = vld [vmem:[#allocation5 + $0x2d0] sm:$0xff]
    %v186 = vld [vmem:[#allocation5 + $0x2d8] sm:$0xff]
    %v187 = vld [vmem:[#allocation5 + $0x2e0] sm:$0xff]
    %v188 = vld [vmem:[#allocation5 + $0x2e8] sm:$0xff]
    %v189 = vld [vmem:[#allocation5 + $0x2f0] sm:$0xff]
    %v190 = vld [vmem:[#allocation5 + $0x2f8] sm:$0xff]
    %v191 = vld [vmem:[#allocation5 + $0x300] sm:$0xff]
    %v192 = vld [vmem:[#allocation5 + $0x308] sm:$0xff]
    %v193 = vld [vmem:[%s2] sm:$0x3]
    %v195 = vlaneseq
    %v196 = vshrl.u32 %v195, 7
    %v197 = vsub.s32 0, %v196
    %v198 = vrot.slane %v193, %v197
    %v199 = vlaneseq
    %v200 = vshrl.u32 %v199, 7
    %v201 = vsub.s32 1, %v200
    %v202 = vrot.slane %v193, %v201
    %v303 = vunpack.c.l.b16 %v95
    %v304 = vunpack.c.h.b16 %v95
    %v305 = vunpack.c.l.b16 %v96
    %v306 = vunpack.c.h.b16 %v96
    %v307 = vunpack.c.l.b16 %v97
    %v308 = vunpack.c.h.b16 %v97
    %v309 = vunpack.c.l.b16 %v98
    %v310 = vunpack.c.h.b16 %v98
    %v311 = vunpack.c.l.b16 %v99
    %v312 = vunpack.c.h.b16 %v99
    %v313 = vunpack.c.l.b16 %v100
    %v314 = vunpack.c.h.b16 %v100
    %v315 = vunpack.c.l.b16 %v101
    %v316 = vunpack.c.h.b16 %v101
    %v317 = vunpack.c.l.b16 %v102
    %v318 = vunpack.c.h.b16 %v102
    %v319 = vunpack.c.l.b16 %v103
    %v320 = vunpack.c.h.b16 %v103
    %v321 = vunpack.c.l.b16 %v104
    %v322 = vunpack.c.h.b16 %v104
    %v323 = vunpack.c.l.b16 %v105
    %v324 = vunpack.c.h.b16 %v105
    %v325 = vunpack.c.l.b16 %v106
    %v326 = vunpack.c.h.b16 %v106
    %v327 = vunpack.c.l.b16 %v107
    %v328 = vunpack.c.h.b16 %v107
    %v329 = vunpack.c.l.b16 %v108
    %v330 = vunpack.c.h.b16 %v108
    %v331 = vunpack.c.l.b16 %v109
    %v332 = vunpack.c.h.b16 %v109
    %v333 = vunpack.c.l.b16 %v110
    %v334 = vunpack.c.h.b16 %v110
    %v335 = vunpack.c.l.b16 %v111
    %v336 = vunpack.c.h.b16 %v111
    %v337 = vunpack.c.l.b16 %v112
    %v338 = vunpack.c.h.b16 %v112
    %v339 = vunpack.c.l.b16 %v113
    %v340 = vunpack.c.h.b16 %v113
    %v341 = vunpack.c.l.b16 %v114
    %v342 = vunpack.c.h.b16 %v114
    %v343 = vunpack.c.l.b16 %v115
    %v344 = vunpack.c.h.b16 %v115
    %v345 = vunpack.c.l.b16 %v116
    %v346 = vunpack.c.h.b16 %v116
    %v347 = vunpack.c.l.b16 %v117
    %v348 = vunpack.c.h.b16 %v117
    %v349 = vunpack.c.l.b16 %v118
    %v350 = vunpack.c.h.b16 %v118
    %v351 = vunpack.c.l.b16 %v119
    %v352 = vunpack.c.h.b16 %v119
    %v353 = vunpack.c.l.b16 %v120
    %v354 = vunpack.c.h.b16 %v120
    %v355 = vunpack.c.l.b16 %v121
    %v356 = vunpack.c.h.b16 %v121
    %v357 = vunpack.c.l.b16 %v122
    %v358 = vunpack.c.h.b16 %v122
    %v359 = vunpack.c.l.b16 %v123
    %v360 = vunpack.c.h.b16 %v123
    %v361 = vunpack.c.l.b16 %v124
    %v362 = vunpack.c.h.b16 %v124
    %v363 = vunpack.c.l.b16 %v125
    %v364 = vunpack.c.h.b16 %v125
    %v365 = vunpack.c.l.b16 %v126
    %v366 = vunpack.c.h.b16 %v126
    %v367 = vunpack.c.l.b16 %v127
    %v368 = vunpack.c.h.b16 %v127
    %v369 = vunpack.c.l.b16 %v128
    %v370 = vunpack.c.h.b16 %v128
    %v371 = vunpack.c.l.b16 %v129
    %v372 = vunpack.c.h.b16 %v129
    %v373 = vunpack.c.l.b16 %v130
    %v374 = vunpack.c.h.b16 %v130
    %v375 = vunpack.c.l.b16 %v131
    %v376 = vunpack.c.h.b16 %v131
    %v377 = vunpack.c.l.b16 %v132
    %v378 = vunpack.c.h.b16 %v132
    %v379 = vunpack.c.l.b16 %v133
    %v380 = vunpack.c.h.b16 %v133
    %v381 = vunpack.c.l.b16 %v134
    %v382 = vunpack.c.h.b16 %v134
    %v383 = vunpack.c.l.b16 %v135
    %v384 = vunpack.c.h.b16 %v135
    %v385 = vunpack.c.l.b16 %v136
    %v386 = vunpack.c.h.b16 %v136
    %v387 = vunpack.c.l.b16 %v137
    %v388 = vunpack.c.h.b16 %v137
    %v389 = vunpack.c.l.b16 %v138
    %v390 = vunpack.c.h.b16 %v138
    %v391 = vunpack.c.l.b16 %v139
    %v392 = vunpack.c.h.b16 %v139
    %v393 = vunpack.c.l.b16 %v140
    %v394 = vunpack.c.h.b16 %v140
    %v395 = vunpack.c.l.b16 %v141
    %v396 = vunpack.c.h.b16 %v141
    %v397 = vunpack.c.l.b16 %v142
    %v398 = vunpack.c.h.b16 %v142
    %v399 = vunpack.c.l.b16 %v143
    %v400 = vunpack.c.h.b16 %v143
    %v401 = vunpack.c.l.b16 %v144
    %v402 = vunpack.c.h.b16 %v144
    %v403 = vunpack.c.l.b16 %v145
    %v404 = vunpack.c.h.b16 %v145
    %v405 = vunpack.c.l.b16 %v146
    %v406 = vunpack.c.h.b16 %v146
    %v407 = vunpack.c.l.b16 %v147
    %v408 = vunpack.c.h.b16 %v147
    %v409 = vunpack.c.l.b16 %v148
    %v410 = vunpack.c.h.b16 %v148
    %v411 = vunpack.c.l.b16 %v149
    %v412 = vunpack.c.h.b16 %v149
    %v413 = vunpack.c.l.b16 %v150
    %v414 = vunpack.c.h.b16 %v150
    %v415 = vunpack.c.l.b16 %v151
    %v416 = vunpack.c.h.b16 %v151
    %v417 = vunpack.c.l.b16 %v152
    %v418 = vunpack.c.h.b16 %v152
    %v419 = vunpack.c.l.b16 %v153
    %v420 = vunpack.c.h.b16 %v153
    %v421 = vunpack.c.l.b16 %v154
    %v422 = vunpack.c.h.b16 %v154
    %v423 = vunpack.c.l.b16 %v155
    %v424 = vunpack.c.h.b16 %v155
    %v425 = vunpack.c.l.b16 %v156
    %v426 = vunpack.c.h.b16 %v156
    %v427 = vunpack.c.l.b16 %v157
    %v428 = vunpack.c.h.b16 %v157
    %v429 = vunpack.c.l.b16 %v158
    %v430 = vunpack.c.h.b16 %v158
    %v431 = vunpack.c.l.b16 %v159
    %v432 = vunpack.c.h.b16 %v159
    %v433 = vunpack.c.l.b16 %v160
    %v434 = vunpack.c.h.b16 %v160
    %v435 = vunpack.c.l.b16 %v161
    %v436 = vunpack.c.h.b16 %v161
    %v437 = vunpack.c.l.b16 %v162
    %v438 = vunpack.c.h.b16 %v162
    %v439 = vunpack.c.l.b16 %v163
    %v440 = vunpack.c.h.b16 %v163
    %v441 = vunpack.c.l.b16 %v164
    %v442 = vunpack.c.h.b16 %v164
    %v443 = vunpack.c.l.b16 %v165
    %v444 = vunpack.c.h.b16 %v165
    %v445 = vunpack.c.l.b16 %v166
    %v446 = vunpack.c.h.b16 %v166
    %v447 = vunpack.c.l.b16 %v167
    %v448 = vunpack.c.h.b16 %v167
    %v449 = vunpack.c.l.b16 %v168
    %v450 = vunpack.c.h.b16 %v168
    %v451 = vunpack.c.l.b16 %v169
    %v452 = vunpack.c.h.b16 %v169
    %v453 = vunpack.c.l.b16 %v170
    %v454 = vunpack.c.h.b16 %v170
    %v455 = vunpack.c.l.b16 %v171
    %v456 = vunpack.c.h.b16 %v171
    %v457 = vunpack.c.l.b16 %v172
    %v458 = vunpack.c.h.b16 %v172
    %v459 = vunpack.c.l.b16 %v173
    %v460 = vunpack.c.h.b16 %v173
    %v461 = vunpack.c.l.b16 %v174
    %v462 = vunpack.c.h.b16 %v174
    %v463 = vunpack.c.l.b16 %v175
    %v464 = vunpack.c.h.b16 %v175
    %v465 = vunpack.c.l.b16 %v176
    %v466 = vunpack.c.h.b16 %v176
    %v467 = vunpack.c.l.b16 %v177
    %v468 = vunpack.c.h.b16 %v177
    %v469 = vunpack.c.l.b16 %v178
    %v470 = vunpack.c.h.b16 %v178
    %v471 = vunpack.c.l.b16 %v179
    %v472 = vunpack.c.h.b16 %v179
    %v473 = vunpack.c.l.b16 %v180
    %v474 = vunpack.c.h.b16 %v180
    %v475 = vunpack.c.l.b16 %v181
    %v476 = vunpack.c.h.b16 %v181
    %v477 = vunpack.c.l.b16 %v182
    %v478 = vunpack.c.h.b16 %v182
    %v479 = vunpack.c.l.b16 %v183
    %v480 = vunpack.c.h.b16 %v183
    %v481 = vunpack.c.l.b16 %v184
    %v482 = vunpack.c.h.b16 %v184
    %v483 = vunpack.c.l.b16 %v185
    %v484 = vunpack.c.h.b16 %v185
    %v485 = vunpack.c.l.b16 %v186
    %v486 = vunpack.c.h.b16 %v186
    %v487 = vunpack.c.l.b16 %v187
    %v488 = vunpack.c.h.b16 %v187
    %v489 = vunpack.c.l.b16 %v188
    %v490 = vunpack.c.h.b16 %v188
    %v491 = vunpack.c.l.b16 %v189
    %v492 = vunpack.c.h.b16 %v189
    %v493 = vunpack.c.l.b16 %v190
    %v494 = vunpack.c.h.b16 %v190
    %v495 = vunpack.c.l.b16 %v191
    %v496 = vunpack.c.h.b16 %v191
    %v497 = vunpack.c.l.b16 %v192
    %v498 = vunpack.c.h.b16 %v192
    %v499 = vpack.c.b16 %v305, %v303
    %v500 = vpack.c.b16 %v306, %v304
    %v501 = vpack.c.b16 %v309, %v307
    %v502 = vpack.c.b16 %v310, %v308
    %v503 = vpack.c.b16 %v313, %v311
    %v504 = vpack.c.b16 %v314, %v312
    %v505 = vpack.c.b16 %v317, %v315
    %v506 = vpack.c.b16 %v318, %v316
    %v507 = vpack.c.b16 %v321, %v319
    %v508 = vpack.c.b16 %v322, %v320
    %v509 = vpack.c.b16 %v325, %v323
    %v510 = vpack.c.b16 %v326, %v324
    %v511 = vpack.c.b16 %v329, %v327
    %v512 = vpack.c.b16 %v330, %v328
    %v513 = vpack.c.b16 %v333, %v331
    %v514 = vpack.c.b16 %v334, %v332
    %v515 = vpack.c.b16 %v337, %v335
    %v516 = vpack.c.b16 %v338, %v336
    %v517 = vpack.c.b16 %v341, %v339
    %v518 = vpack.c.b16 %v342, %v340
    %v519 = vpack.c.b16 %v345, %v343
    %v520 = vpack.c.b16 %v346, %v344
    %v521 = vpack.c.b16 %v349, %v347
    %v522 = vpack.c.b16 %v350, %v348
    %v523 = vpack.c.b16 %v353, %v351
    %v524 = vpack.c.b16 %v354, %v352
    %v525 = vpack.c.b16 %v357, %v355
    %v526 = vpack.c.b16 %v358, %v356
    %v527 = vpack.c.b16 %v361, %v359
    %v528 = vpack.c.b16 %v362, %v360
    %v529 = vpack.c.b16 %v365, %v363
    %v530 = vpack.c.b16 %v366, %v364
    %v531 = vpack.c.b16 %v369, %v367
    %v532 = vpack.c.b16 %v370, %v368
    %v533 = vpack.c.b16 %v373, %v371
    %v534 = vpack.c.b16 %v374, %v372
    %v535 = vpack.c.b16 %v377, %v375
    %v536 = vpack.c.b16 %v378, %v376
    %v537 = vpack.c.b16 %v381, %v379
    %v538 = vpack.c.b16 %v382, %v380
    %v539 = vpack.c.b16 %v385, %v383
    %v540 = vpack.c.b16 %v386, %v384
    %v541 = vpack.c.b16 %v389, %v387
    %v542 = vpack.c.b16 %v390, %v388
    %v543 = vpack.c.b16 %v393, %v391
    %v544 = vpack.c.b16 %v394, %v392
    %v545 = vpack.c.b16 %v397, %v395
    %v546 = vpack.c.b16 %v398, %v396
    %v547 = vpack.c.b16 %v401, %v399
    %v548 = vpack.c.b16 %v402, %v400
    %v549 = vpack.c.b16 %v405, %v403
    %v550 = vpack.c.b16 %v406, %v404
    %v551 = vpack.c.b16 %v409, %v407
    %v552 = vpack.c.b16 %v410, %v408
    %v553 = vpack.c.b16 %v413, %v411
    %v554 = vpack.c.b16 %v414, %v412
    %v555 = vpack.c.b16 %v417, %v415
    %v556 = vpack.c.b16 %v418, %v416
    %v557 = vpack.c.b16 %v421, %v419
    %v558 = vpack.c.b16 %v422, %v420
    %v559 = vpack.c.b16 %v425, %v423
    %v560 = vpack.c.b16 %v426, %v424
    %v561 = vpack.c.b16 %v429, %v427
    %v562 = vpack.c.b16 %v430, %v428
    %v563 = vpack.c.b16 %v433, %v431
    %v564 = vpack.c.b16 %v434, %v432
    %v565 = vpack.c.b16 %v437, %v435
    %v566 = vpack.c.b16 %v438, %v436
    %v567 = vpack.c.b16 %v441, %v439
    %v568 = vpack.c.b16 %v442, %v440
    %v569 = vpack.c.b16 %v445, %v443
    %v570 = vpack.c.b16 %v446, %v444
    %v571 = vpack.c.b16 %v449, %v447
    %v572 = vpack.c.b16 %v450, %v448
    %v573 = vpack.c.b16 %v453, %v451
    %v574 = vpack.c.b16 %v454, %v452
    %v575 = vpack.c.b16 %v457, %v455
    %v576 = vpack.c.b16 %v458, %v456
    %v577 = vpack.c.b16 %v461, %v459
    %v578 = vpack.c.b16 %v462, %v460
    %v579 = vpack.c.b16 %v465, %v463
    %v580 = vpack.c.b16 %v466, %v464
    %v581 = vpack.c.b16 %v469, %v467
    %v582 = vpack.c.b16 %v470, %v468
    %v583 = vpack.c.b16 %v473, %v471
    %v584 = vpack.c.b16 %v474, %v472
    %v585 = vpack.c.b16 %v477, %v475
    %v586 = vpack.c.b16 %v478, %v476
    %v587 = vpack.c.b16 %v481, %v479
    %v588 = vpack.c.b16 %v482, %v480
    %v589 = vpack.c.b16 %v485, %v483
    %v590 = vpack.c.b16 %v486, %v484
    %v591 = vpack.c.b16 %v489, %v487
    %v592 = vpack.c.b16 %v490, %v488
    %v593 = vpack.c.b16 %v493, %v491
    %v594 = vpack.c.b16 %v494, %v492
    %v595 = vpack.c.b16 %v497, %v495
    %v596 = vpack.c.b16 %v498, %v496
    %vm695 = vcmask 130048
    %v697 = vsel %vm695, %v94, 0
    %699 = vmatprep.subr.bf16.mxu0 %v500
    %700 = vmatpush1.bf16.msra.mxu0 %v499
    %701 = vmatprep.subr.bf16.mxu0 %v502
    %702 = vmatpush1.bf16.msra.mxu0 %v501
    %703 = vmatprep.subr.bf16.mxu0 %v504
    %704 = vmatpush1.bf16.msra.mxu0 %v503
    %705 = vmatprep.subr.bf16.mxu0 %v506
    %706 = vmatpush1.bf16.msra.mxu0 %v505
    %707 = vmatprep.subr.bf16.mxu0 %v508
    %708 = vmatpush1.bf16.msra.mxu0 %v507
    %709 = vmatprep.subr.bf16.mxu0 %v510
    %710 = vmatpush1.bf16.msra.mxu0 %v509
    %711 = vmatprep.subr.bf16.mxu0 %v512
    %712 = vmatpush1.bf16.msra.mxu0 %v511
    %713 = vmatprep.subr.bf16.mxu0 %v514
    %714 = vmatpush1.bf16.msra.mxu0 %v513
    %715 = vmatprep.subr.bf16.mxu0 %v516
    %716 = vmatpush1.bf16.msra.mxu0 %v515
    %717 = vmatprep.subr.bf16.mxu0 %v518
    %718 = vmatpush1.bf16.msra.mxu0 %v517
    %719 = vmatprep.subr.bf16.mxu0 %v520
    %720 = vmatpush1.bf16.msra.mxu0 %v519
    %721 = vmatprep.subr.bf16.mxu0 %v522
    %722 = vmatpush1.bf16.msra.mxu0 %v521
    %723 = vmatprep.subr.bf16.mxu0 %v524
    %724 = vmatpush1.bf16.msra.mxu0 %v523
    %725 = vmatprep.subr.bf16.mxu0 %v526
    %726 = vmatpush1.bf16.msra.mxu0 %v525
    %727 = vmatprep.subr.bf16.mxu0 %v528
    %728 = vmatpush1.bf16.msra.mxu0 %v527
    %729 = vmatprep.subr.bf16.mxu0 %v530
    %730 = vmatpush1.bf16.msra.mxu0 %v529
    %731 = vmatprep.mubr.bf16.mxu0 %v89
    %732 = vmatmul.mubr.bf16.gmra.mrb[0].mxu0 %v88
    %v733 = vpop.f32.mrb[0].mxu0
    %v734 = vadd.f32 %v198, %v733
    %v735 = vpop.f32.mrb[0].mxu0
    %v736 = vadd.f32 %v202, %v735
    %v737 = vpop.f32.mrb[0].mxu0
    %v738 = vpop.f32.mrb[0].mxu0
    %739 = vdwg.mxu0
    %740 = vmatprep.subr.bf16.mxu0 %v532
    %741 = vmatpush1.bf16.msra.mxu0 %v531
    %742 = vmatprep.subr.bf16.mxu0 %v534
    %743 = vmatpush1.bf16.msra.mxu0 %v533
    %744 = vmatprep.subr.bf16.mxu0 %v536
    %745 = vmatpush1.bf16.msra.mxu0 %v535
    %746 = vmatprep.subr.bf16.mxu0 %v538
    %747 = vmatpush1.bf16.msra.mxu0 %v537
    %748 = vmatprep.subr.bf16.mxu0 %v540
    %749 = vmatpush1.bf16.msra.mxu0 %v539
    %750 = vmatprep.subr.bf16.mxu0 %v542
    %751 = vmatpush1.bf16.msra.mxu0 %v541
    %752 = vmatprep.subr.bf16.mxu0 %v544
    %753 = vmatpush1.bf16.msra.mxu0 %v543
    %754 = vmatprep.subr.bf16.mxu0 %v546
    %755 = vmatpush1.bf16.msra.mxu0 %v545
    %756 = vmatprep.subr.bf16.mxu0 %v548
    %757 = vmatpush1.bf16.msra.mxu0 %v547
    %758 = vmatprep.subr.bf16.mxu0 %v550
    %759 = vmatpush1.bf16.msra.mxu0 %v549
    %760 = vmatprep.subr.bf16.mxu0 %v552
    %761 = vmatpush1.bf16.msra.mxu0 %v551
    %762 = vmatprep.subr.bf16.mxu0 %v554
    %763 = vmatpush1.bf16.msra.mxu0 %v553
    %764 = vmatprep.subr.bf16.mxu0 %v556
    %765 = vmatpush1.bf16.msra.mxu0 %v555
    %766 = vmatprep.subr.bf16.mxu0 %v558
    %767 = vmatpush1.bf16.msra.mxu0 %v557
    %768 = vmatprep.subr.bf16.mxu0 %v560
    %769 = vmatpush1.bf16.msra.mxu0 %v559
    %770 = vmatprep.subr.bf16.mxu0 %v562
    %771 = vmatpush1.bf16.msra.mxu0 %v561
    %772 = vmatprep.mubr.bf16.mxu0 %v91
    %773 = vmatmul.mubr.bf16.gmra.mrb[0].mxu0 %v90
    %v774 = vpop.f32.mrb[0].mxu0
    %v775 = vadd.f32 %v734, %v774
    %v776 = vpop.f32.mrb[0].mxu0
    %v777 = vadd.f32 %v736, %v776
    %v778 = vpop.f32.mrb[0].mxu0
    %v779 = vpop.f32.mrb[0].mxu0
    %780 = vdwg.mxu0
    %781 = vmatprep.subr.bf16.mxu0 %v564
    %782 = vmatpush1.bf16.msra.mxu0 %v563
    %783 = vmatprep.subr.bf16.mxu0 %v566
    %784 = vmatpush1.bf16.msra.mxu0 %v565
    %785 = vmatprep.subr.bf16.mxu0 %v568
    %786 = vmatpush1.bf16.msra.mxu0 %v567
    %787 = vmatprep.subr.bf16.mxu0 %v570
    %788 = vmatpush1.bf16.msra.mxu0 %v569
    %789 = vmatprep.subr.bf16.mxu0 %v572
    %790 = vmatpush1.bf16.msra.mxu0 %v571
    %791 = vmatprep.subr.bf16.mxu0 %v574
    %792 = vmatpush1.bf16.msra.mxu0 %v573
    %793 = vmatprep.subr.bf16.mxu0 %v576
    %794 = vmatpush1.bf16.msra.mxu0 %v575
    %795 = vmatprep.subr.bf16.mxu0 %v578
    %796 = vmatpush1.bf16.msra.mxu0 %v577
    %797 = vmatprep.subr.bf16.mxu0 %v580
    %798 = vmatpush1.bf16.msra.mxu0 %v579
    %799 = vmatprep.subr.bf16.mxu0 %v582
    %800 = vmatpush1.bf16.msra.mxu0 %v581
    %801 = vmatprep.subr.bf16.mxu0 %v584
    %802 = vmatpush1.bf16.msra.mxu0 %v583
    %803 = vmatprep.subr.bf16.mxu0 %v586
    %804 = vmatpush1.bf16.msra.mxu0 %v585
    %805 = vmatprep.subr.bf16.mxu0 %v588
    %806 = vmatpush1.bf16.msra.mxu0 %v587
    %807 = vmatprep.subr.bf16.mxu0 %v590
    %808 = vmatpush1.bf16.msra.mxu0 %v589
    %809 = vmatprep.subr.bf16.mxu0 %v592
    %810 = vmatpush1.bf16.msra.mxu0 %v591
    %811 = vmatprep.subr.bf16.mxu0 %v594
    %812 = vmatpush1.bf16.msra.mxu0 %v593
    %813 = vmatprep.mubr.bf16.mxu0 %v93
    %814 = vmatmul.mubr.bf16.gmra.mrb[0].mxu0 %v92
    %v815 = vpop.f32.mrb[0].mxu0
    %v816 = vadd.f32 %v775, %v815
    %v817 = vpop.f32.mrb[0].mxu0
    %v818 = vadd.f32 %v777, %v817
    %v819 = vpop.f32.mrb[0].mxu0
    %v820 = vpop.f32.mrb[0].mxu0
    %821 = vdwg.mxu0
    %822 = vmatprep.subr.bf16.mxu0 %v596
    %823 = vmatpush1.bf16.msra.mxu0 %v595
    %824 = vmatprep.subr.bf16.mxu0 0
    %825 = vmatpush1.bf16.msra.mxu0 0
    %826 = vmatprep.subr.bf16.mxu0 0
    %827 = vmatpush1.bf16.msra.mxu0 0
    %828 = vmatprep.subr.bf16.mxu0 0
    %829 = vmatpush1.bf16.msra.mxu0 0
    %830 = vmatprep.subr.bf16.mxu0 0
    %831 = vmatpush1.bf16.msra.mxu0 0
    %832 = vmatprep.subr.bf16.mxu0 0
    %833 = vmatpush1.bf16.msra.mxu0 0
    %834 = vmatprep.subr.bf16.mxu0 0
    %835 = vmatpush1.bf16.msra.mxu0 0
    %836 = vmatprep.subr.bf16.mxu0 0
    %837 = vmatpush1.bf16.msra.mxu0 0
    %838 = vmatprep.subr.bf16.mxu0 0
    %839 = vmatpush1.bf16.msra.mxu0 0
    %840 = vmatprep.subr.bf16.mxu0 0
    %841 = vmatpush1.bf16.msra.mxu0 0
    %842 = vmatprep.subr.bf16.mxu0 0
    %843 = vmatpush1.bf16.msra.mxu0 0
    %844 = vmatprep.subr.bf16.mxu0 0
    %845 = vmatpush1.bf16.msra.mxu0 0
    %846 = vmatprep.subr.bf16.mxu0 0
    %847 = vmatpush1.bf16.msra.mxu0 0
    %848 = vmatprep.subr.bf16.mxu0 0
    %849 = vmatpush1.bf16.msra.mxu0 0
    %850 = vmatprep.subr.bf16.mxu0 0
    %851 = vmatpush1.bf16.msra.mxu0 0
    %852 = vmatprep.subr.bf16.mxu0 0
    %853 = vmatpush1.bf16.msra.mxu0 0
    %854 = vmatprep.mubr.bf16.mxu0 0
    %855 = vmatmul.mubr.bf16.gmra.mrb[0].mxu0 %v697
    %v856 = vpop.f32.mrb[0].mxu0
    %v857 = vadd.f32 %v816, %v856
    %v858 = vpop.f32.mrb[0].mxu0
    %v859 = vadd.f32 %v818, %v858
    %v860 = vpop.f32.mrb[0].mxu0
    %v861 = vpop.f32.mrb[0].mxu0
    %862 = vdwg.mxu0
    %v863 = vmul.f32 %v857, 0.5
    %v864 = vmul.f32 %v859, 0.5
    %v865 = vmul.f32 %v857, 0.70710677
    %v866 = vmul.f32 %v859, 0.70710677
    %v867 = verf.f32.pop %v865
    %v868 = verf.f32.pop %v866
    %v869 = vadd.f32 %v867, 1.0
    %v870 = vadd.f32 %v868, 1.0
    %v871 = vmul.f32 %v863, %v869
    %v872 = vmul.f32 %v864, %v870
    %v873 = vpack.c.bf16 %v871, %v871
    %v874 = vpack.c.bf16 %v872, %v872
    %v875 = vld [vmem:[#allocation7] sm:$0xf]
    %v876 = vld [vmem:[#allocation7 + $0x4] sm:$0xf]
    %v877 = vld [vmem:[#allocation7 + $0x8] sm:$0xf]
    %v878 = vld [vmem:[#allocation7 + $0xc] sm:$0xf]
    %v879 = vld [vmem:[#allocation7 + $0x10] sm:$0xf]
    %v880 = vld [vmem:[#allocation7 + $0x14] sm:$0xf]
    %v881 = vld [vmem:[#allocation7 + $0x18] sm:$0xf]
    %v882 = vld [vmem:[#allocation7 + $0x1c] sm:$0xf]
    %v883 = vld [vmem:[#allocation7 + $0x20] sm:$0xf]
    %v884 = vld [vmem:[#allocation7 + $0x24] sm:$0xf]
    %v885 = vld [vmem:[#allocation7 + $0x28] sm:$0xf]
    %v886 = vld [vmem:[#allocation7 + $0x2c] sm:$0xf]
    %v887 = vld [vmem:[#allocation7 + $0x30] sm:$0xf]
    %v888 = vld [vmem:[#allocation7 + $0x34] sm:$0xf]
    %v889 = vld [vmem:[#allocation7 + $0x38] sm:$0xf]
    %v890 = vld [vmem:[#allocation7 + $0x3c] sm:$0xf]
    %v891 = vld [vmem:[#allocation7 + $0x40] sm:$0xf]
    %v892 = vld [vmem:[#allocation7 + $0x44] sm:$0xf]
    %v893 = vld [vmem:[#allocation7 + $0x48] sm:$0xf]
    %v894 = vld [vmem:[#allocation7 + $0x4c] sm:$0xf]
    %v895 = vld [vmem:[#allocation7 + $0x50] sm:$0xf]
    %v896 = vld [vmem:[#allocation7 + $0x54] sm:$0xf]
    %v897 = vld [vmem:[#allocation7 + $0x58] sm:$0xf]
    %v898 = vld [vmem:[#allocation7 + $0x5c] sm:$0xf]
    %v899 = vld [vmem:[#allocation7 + $0x60] sm:$0xf]
    %v900 = vld [vmem:[#allocation7 + $0x64] sm:$0xf]
    %v901 = vld [vmem:[#allocation7 + $0x68] sm:$0xf]
    %v902 = vld [vmem:[#allocation7 + $0x6c] sm:$0xf]
    %v903 = vld [vmem:[#allocation7 + $0x70] sm:$0xf]
    %v904 = vld [vmem:[#allocation7 + $0x74] sm:$0xf]
    %v905 = vld [vmem:[#allocation7 + $0x78] sm:$0xf]
    %v906 = vld [vmem:[#allocation7 + $0x7c] sm:$0xf]
    %v907 = vld [vmem:[%s4] sm:$0x1]
    %v909 = vlaneseq
    %v910 = vshrl.u32 %v909, 7
    %v911 = vsub.s32 0, %v910
    %v912 = vrot.slane %v907, %v911
    %v946 = vunpack.c.l.b16 %v875
    %v947 = vunpack.c.l.b16 %v876
    %v948 = vunpack.c.l.b16 %v877
    %v949 = vunpack.c.l.b16 %v878
    %v950 = vunpack.c.l.b16 %v879
    %v951 = vunpack.c.l.b16 %v880
    %v952 = vunpack.c.l.b16 %v881
    %v953 = vunpack.c.l.b16 %v882
    %v954 = vunpack.c.l.b16 %v883
    %v955 = vunpack.c.l.b16 %v884
    %v956 = vunpack.c.l.b16 %v885
    %v957 = vunpack.c.l.b16 %v886
    %v958 = vunpack.c.l.b16 %v887
    %v959 = vunpack.c.l.b16 %v888
    %v960 = vunpack.c.l.b16 %v889
    %v961 = vunpack.c.l.b16 %v890
    %v962 = vunpack.c.l.b16 %v891
    %v963 = vunpack.c.l.b16 %v892
    %v964 = vunpack.c.l.b16 %v893
    %v965 = vunpack.c.l.b16 %v894
    %v966 = vunpack.c.l.b16 %v895
    %v967 = vunpack.c.l.b16 %v896
    %v968 = vunpack.c.l.b16 %v897
    %v969 = vunpack.c.l.b16 %v898
    %v970 = vunpack.c.l.b16 %v899
    %v971 = vunpack.c.l.b16 %v900
    %v972 = vunpack.c.l.b16 %v901
    %v973 = vunpack.c.l.b16 %v902
    %v974 = vunpack.c.l.b16 %v903
    %v975 = vunpack.c.l.b16 %v904
    %v976 = vunpack.c.l.b16 %v905
    %v977 = vunpack.c.l.b16 %v906
    %v978 = vpack.c.b16 %v947, %v946
    %v979 = vpack.c.b16 %v949, %v948
    %v980 = vpack.c.b16 %v951, %v950
    %v981 = vpack.c.b16 %v953, %v952
    %v982 = vpack.c.b16 %v955, %v954
    %v983 = vpack.c.b16 %v957, %v956
    %v984 = vpack.c.b16 %v959, %v958
    %v985 = vpack.c.b16 %v961, %v960
    %v986 = vpack.c.b16 %v963, %v962
    %v987 = vpack.c.b16 %v965, %v964
    %v988 = vpack.c.b16 %v967, %v966
    %v989 = vpack.c.b16 %v969, %v968
    %v990 = vpack.c.b16 %v971, %v970
    %v991 = vpack.c.b16 %v973, %v972
    %v992 = vpack.c.b16 %v975, %v974
    %v993 = vpack.c.b16 %v977, %v976
    %1010 = vmatprep.subr.bf16.mxu0 0
    %1011 = vmatpush1.bf16.msra.mxu0 %v978
    %1012 = vmatprep.subr.bf16.mxu0 0
    %1013 = vmatpush1.bf16.msra.mxu0 %v979
    %1014 = vmatprep.subr.bf16.mxu0 0
    %1015 = vmatpush1.bf16.msra.mxu0 %v980
    %1016 = vmatprep.subr.bf16.mxu0 0
    %1017 = vmatpush1.bf16.msra.mxu0 %v981
    %1018 = vmatprep.subr.bf16.mxu0 0
    %1019 = vmatpush1.bf16.msra.mxu0 %v982
    %1020 = vmatprep.subr.bf16.mxu0 0
    %1021 = vmatpush1.bf16.msra.mxu0 %v983
    %1022 = vmatprep.subr.bf16.mxu0 0
    %1023 = vmatpush1.bf16.msra.mxu0 %v984
    %1024 = vmatprep.subr.bf16.mxu0 0
    %1025 = vmatpush1.bf16.msra.mxu0 %v985
    %1026 = vmatprep.subr.bf16.mxu0 0
    %1027 = vmatpush1.bf16.msra.mxu0 %v986
    %1028 = vmatprep.subr.bf16.mxu0 0
    %1029 = vmatpush1.bf16.msra.mxu0 %v987
    %1030 = vmatprep.subr.bf16.mxu0 0
    %1031 = vmatpush1.bf16.msra.mxu0 %v988
    %1032 = vmatprep.subr.bf16.mxu0 0
    %1033 = vmatpush1.bf16.msra.mxu0 %v989
    %1034 = vmatprep.subr.bf16.mxu0 0
    %1035 = vmatpush1.bf16.msra.mxu0 %v990
    %1036 = vmatprep.subr.bf16.mxu0 0
    %1037 = vmatpush1.bf16.msra.mxu0 %v991
    %1038 = vmatprep.subr.bf16.mxu0 0
    %1039 = vmatpush1.bf16.msra.mxu0 %v992
    %1040 = vmatprep.subr.bf16.mxu0 0
    %1041 = vmatpush1.bf16.msra.mxu0 %v993
    %1042 = vmatprep.mubr.bf16.mxu0 %v874
    %1043 = vmatmul.mubr.bf16.gmra.mrb[0].mxu0 %v873
    %v1044 = vpop.f32.mrb[0].mxu0
    %v1045 = vadd.f32 %v912, %v1044
    %v1046 = vpop.f32.mrb[0].mxu0
    %v1047 = vpop.f32.mrb[0].mxu0
    %v1048 = vpop.f32.mrb[0].mxu0
    %1049 = vdwg.mxu0
    %v1050 = vmul.f32 %v1045, 0.5
    %v1051 = vmul.f32 %v1045, 0.70710677
    %v1052 = verf.f32.pop %v1051
    %v1053 = vadd.f32 %v1052, 1.0
    %v1054 = vmul.f32 %v1050, %v1053
    %v1055 = vpack.c.bf16 %v1054, %v1054
    %v1056 = vld [vmem:[#allocation8] sm:$0xf]
    %v1057 = vld [vmem:[#allocation8 + $0x4] sm:$0xf]
    %v1058 = vld [vmem:[#allocation8 + $0x8] sm:$0xf]
    %v1059 = vld [vmem:[#allocation8 + $0xc] sm:$0xf]
    %v1060 = vld [vmem:[#allocation8 + $0x10] sm:$0xf]
    %v1061 = vld [vmem:[#allocation8 + $0x14] sm:$0xf]
    %v1062 = vld [vmem:[#allocation8 + $0x18] sm:$0xf]
    %v1063 = vld [vmem:[#allocation8 + $0x1c] sm:$0xf]
    %v1064 = vld [vmem:[#allocation8 + $0x20] sm:$0xf]
    %v1065 = vld [vmem:[#allocation8 + $0x24] sm:$0xf]
    %v1066 = vld [vmem:[#allocation8 + $0x28] sm:$0xf]
    %v1067 = vld [vmem:[#allocation8 + $0x2c] sm:$0xf]
    %v1068 = vld [vmem:[#allocation8 + $0x30] sm:$0xf]
    %v1069 = vld [vmem:[#allocation8 + $0x34] sm:$0xf]
    %v1070 = vld [vmem:[#allocation8 + $0x38] sm:$0xf]
    %v1071 = vld [vmem:[#allocation8 + $0x3c] sm:$0xf]
    %v1072 = vld [vmem:[%s6] sm:$0x1]
    %v1074 = vlaneseq
    %v1075 = vshrl.u32 %v1074, 7
    %v1076 = vsub.s32 0, %v1075
    %v1077 = vrot.slane %v1072, %v1076
    %v1095 = vunpack.c.l.b16 %v1056
    %v1096 = vunpack.c.l.b16 %v1057
    %v1097 = vunpack.c.l.b16 %v1058
    %v1098 = vunpack.c.l.b16 %v1059
    %v1099 = vunpack.c.l.b16 %v1060
    %v1100 = vunpack.c.l.b16 %v1061
    %v1101 = vunpack.c.l.b16 %v1062
    %v1102 = vunpack.c.l.b16 %v1063
    %v1103 = vunpack.c.l.b16 %v1064
    %v1104 = vunpack.c.l.b16 %v1065
    %v1105 = vunpack.c.l.b16 %v1066
    %v1106 = vunpack.c.l.b16 %v1067
    %v1107 = vunpack.c.l.b16 %v1068
    %v1108 = vunpack.c.l.b16 %v1069
    %v1109 = vunpack.c.l.b16 %v1070
    %v1110 = vunpack.c.l.b16 %v1071
    %v1111 = vpack.c.b16 %v1096, %v1095
    %v1112 = vpack.c.b16 %v1098, %v1097
    %v1113 = vpack.c.b16 %v1100, %v1099
    %v1114 = vpack.c.b16 %v1102, %v1101
    %v1115 = vpack.c.b16 %v1104, %v1103
    %v1116 = vpack.c.b16 %v1106, %v1105
    %v1117 = vpack.c.b16 %v1108, %v1107
    %v1118 = vpack.c.b16 %v1110, %v1109
    %1127 = vmatprep.subr.bf16.mxu0 0
    %1128 = vmatpush1.bf16.msra.mxu0 %v1111
    %1129 = vmatprep.subr.bf16.mxu0 0
    %1130 = vmatpush1.bf16.msra.mxu0 %v1112
    %1131 = vmatprep.subr.bf16.mxu0 0
    %1132 = vmatpush1.bf16.msra.mxu0 %v1113
    %1133 = vmatprep.subr.bf16.mxu0 0
    %1134 = vmatpush1.bf16.msra.mxu0 %v1114
    %1135 = vmatprep.subr.bf16.mxu0 0
    %1136 = vmatpush1.bf16.msra.mxu0 %v1115
    %1137 = vmatprep.subr.bf16.mxu0 0
    %1138 = vmatpush1.bf16.msra.mxu0 %v1116
    %1139 = vmatprep.subr.bf16.mxu0 0
    %1140 = vmatpush1.bf16.msra.mxu0 %v1117
    %1141 = vmatprep.subr.bf16.mxu0 0
    %1142 = vmatpush1.bf16.msra.mxu0 %v1118
    %1143 = vmatprep.subr.bf16.mxu0 0
    %1144 = vmatpush1.bf16.msra.mxu0 0
    %1145 = vmatprep.subr.bf16.mxu0 0
    %1146 = vmatpush1.bf16.msra.mxu0 0
    %1147 = vmatprep.subr.bf16.mxu0 0
    %1148 = vmatpush1.bf16.msra.mxu0 0
    %1149 = vmatprep.subr.bf16.mxu0 0
    %1150 = vmatpush1.bf16.msra.mxu0 0
    %1151 = vmatprep.subr.bf16.mxu0 0
    %1152 = vmatpush1.bf16.msra.mxu0 0
    %1153 = vmatprep.subr.bf16.mxu0 0
    %1154 = vmatpush1.bf16.msra.mxu0 0
    %1155 = vmatprep.subr.bf16.mxu0 0
    %1156 = vmatpush1.bf16.msra.mxu0 0
    %1157 = vmatprep.subr.bf16.mxu0 0
    %1158 = vmatpush1.bf16.msra.mxu0 0
    %1159 = vmatprep.mubr.bf16.mxu0 0
    %1160 = vmatmul.mubr.bf16.gmra.mrb[0].mxu0 %v1055
    %v1161 = vpop.f32.mrb[0].mxu0
    %v1162 = vadd.f32 %v1077, %v1161
    %v1163 = vpop.f32.mrb[0].mxu0
    %v1164 = vpop.f32.mrb[0].mxu0
    %v1165 = vpop.f32.mrb[0].mxu0
    %1166 = vdwg.mxu0
    %1167 = vst [vmem:[#allocation10] sm:$0xff] %v1162
    // Predicated region
    $region46: #{tpu_custom_call.1} parent=1 // pred_check
      _
    $region47: #{tpu_custom_call.1} parent=1 // pred_check_branch
      %1169 = sbr.rel (0) target = $region49
    $region48: #{tpu_custom_call.1} parent=1 // pred_region
      %s1171 = ssub.s32 128, 128
      %1172 = vsyncadd [#allocation4], %s1171
      %s1174 = sshll.u32 [#allocation10], 4
      %s1175 = int_to_ptr.vmem [resolvable:$true] %s1174
      %1177 = dma.vmem_to_hbm [thread:$0]  %s1175, 128, %s7, [#allocation4]
    $region49: #{tpu_custom_call.1} parent=1 // pred_fallthru
      _
    // Predicated region
    $region50: #{tpu_custom_call.1} parent=1 // pred_check
      _
    $region51: #{tpu_custom_call.1} parent=1 // pred_check_branch
      %1179 = sbr.rel (0) target = $region53
    $region52: #{tpu_custom_call.1} parent=1 // pred_region
      %1180 = dma.done [#allocation4], 128
    $region53: #{tpu_custom_call.1} parent=1 // pred_fallthru
      _
    %1181 = vsyncpa [#allocation3], 1
    %1182 = vsyncpa [#allocation6], 1
    %1183 = vsyncpa [#allocation9], 1
    %1184 = vsyncpa [#allocation4], 1

</llo_original>
